<compile_context>
chip_gen: v7x
topology: tpu7x:2x2x1
jax: 0.10.0
libtpu: 0.0.40
codegen_flags: <defaults>
</compile_context>

<pallas_src>
import jax
import jax.numpy as jnp
import numpy as np
from jax.experimental import pallas as pl
from jax.experimental.pallas import tpu as pltpu


# ---------------------------------------------------------------------------
# Hardware / budgeting helpers
# ---------------------------------------------------------------------------
def _round_up(x, m):
    return ((int(x) + m - 1) // m) * m


def _vmem_limit_bytes(override=None):
    """Scoped-VMEM limit to request: ~75% of physical, capped at 100 MiB."""
    if override is not None:
        return int(override)
    cap = None
    try:
        cap = int(getattr(pltpu.get_tpu_info(), "vmem_capacity_bytes"))
    except Exception:
        cap = None
    if cap is None:
        # Generation hint instead of a blanket 64 MiB fallback: only v7x-class
        # parts have 64 MiB/TC; v5e/v6e have 128 MiB and should use it.
        kind = ""
        try:
            kind = str(jax.devices()[0].device_kind).lower()
        except Exception:
            pass
        cap = (64 << 20) if ("v7" in kind or "7x" in kind) else (128 << 20)
    return max(32 << 20, min((cap * 3) // 4, 100 << 20))


def _num_tensorcores():
    """Best-effort TensorCores-per-device count (v7x has 2); defaults to 1."""
    try:
        info = pltpu.get_tpu_info()
        for name in ("num_cores", "cores_per_chip", "num_tensorcores"):
            v = getattr(info, name, None)
            if v:
                return max(1, int(v))
    except Exception:
        pass
    try:
        v = getattr(jax.devices()[0], "num_cores", None)
        if v:
            return max(1, int(v))
    except Exception:
        pass
    return 1


def _choose_spatial_tile(S, max_tile, min_tiles=1):
    """Pick a lane-dense S tile.  TS need NOT divide S (cdiv grid + masking);
    it only has to be a multiple of 128 and fit the per-block VMEM budget."""
    pad_s = _round_up(S, 128)
    ts = min(max(128, (max_tile // 128) * 128), pad_s)
    if min_tiles > 1:
        # Keep at least `min_tiles` grid steps so both TensorCores get work.
        ts = min(ts, max(128, _round_up(pl.cdiv(S, min_tiles), 128)))
    return ts


# ---------------------------------------------------------------------------
# Kernels
# ---------------------------------------------------------------------------
def _fused_kernel(x_ref, w1t_ref, w2_ref, o_ref):
    """Single pass per batch: pool + excite + scale.  x tile is (C, S)."""
    x = x_ref[0]                                                   # (C, S)
    # f32-accumulated lane reduce; no explicit full-slab f32 copy is kept live.
    pooled = jnp.mean(x, axis=1, keepdims=True, dtype=jnp.float32)  # (C, 1)

    # Excite on the VPU/XLU: broadcast-multiply + reduce (no MXU for M=1).
    w1t = w1t_ref[...].astype(jnp.float32)                         # (C, hidden)
    w2 = w2_ref[...].astype(jnp.float32)                           # (C, hidden)
    h = jnp.maximum(jnp.sum(w1t * pooled, axis=0, keepdims=True), 0.0)  # (1, hidden)
    s = jnp.sum(w2 * h, axis=1, keepdims=True)                     # (C, 1)
    scale = jax.nn.sigmoid(s)                                      # (C, 1) f32

    # Per-channel (sublane) broadcast multiply; stay in the input dtype.
    o_ref[0] = (x * scale.astype(x.dtype)).astype(o_ref.dtype)


def _make_pool_kernel(S, TS):
    """Pass A: per-(batch, S-tile) partial channel sums, fully parallel grid."""
    need_mask = (S % TS) != 0

    def kernel(x_ref, psum_ref):
        xt = x_ref[0]                                              # (C, TS)
        if need_mask:
            st = pl.program_id(1)
            valid = S - st * TS            # >= TS for every non-last tile
            lane = jax.lax.broadcasted_iota(jnp.int32, xt.shape, 1)
            xt = jnp.where(lane < valid, xt, jnp.zeros_like(xt))
        # f32 accumulation of the lane reduce; result is only (C, 1).
        psum_ref[0, 0] = jnp.sum(xt, axis=1, keepdims=True, dtype=jnp.float32)

    return kernel


def _scale_kernel(x_ref, s_ref, o_ref):
    """Pass B: out tile = x tile * per-channel sigmoid scale (lane broadcast)."""
    x = x_ref[0]                                                   # (C, TS)
    scale = s_ref[0]                                               # (C, 1) f32
    o_ref[0] = (x * scale.astype(x.dtype)).astype(o_ref.dtype)


# ---------------------------------------------------------------------------
# Wrapper
# ---------------------------------------------------------------------------
def squeeze_excitation(x_ncdhw, w1, w2, *, spatial_tile=None, vmem_limit_bytes=None):
    """x_ncdhw: (N, C, D, H, W); w1: (C//r, C); w2: (C, C//r) (bias-free 1x1x1 convs).

    spatial_tile: optional S-tile width (rounded up to a multiple of 128; need
      not divide S) -- forces the two-pass path.  Intended for testing; real
      shapes should let the auto heuristic pick fused vs. big-tile two-pass.
    vmem_limit_bytes: optional explicit scoped-VMEM budget override.
    """
    N, C, D, H, W = x_ncdhw.shape
    S = D * H * W
    hidden = w1.shape[0]
    itemsize = jnp.dtype(x_ncdhw.dtype).itemsize

    # Free reshape: channels on sublanes, spatial on the lane axis.
    x_ncs = x_ncdhw.reshape(N, C, S)

    vmem_limit = _vmem_limit_bytes(vmem_limit_bytes)
    # Dtype-aware per-element VMEM need of a (C, TS) block: double-buffered
    # input + output blocks (2*2*itemsize) plus ~4 B f32 reduce/temp headroom.
    per_elem = 4 * itemsize + 4
    c_pad = _round_up(C, 8)                    # sublane padding
    budget = (vmem_limit * 8) // 10            # ~20% headroom on the scoped limit
    max_tile = max(128, budget // (c_pad * per_elem))

    num_cores = _num_tensorcores()
    # On a 2-TC part (v7x) a tiny batch idles a core on the fused grid=(N,) path;
    # the two-pass grids (N, nt) are fully parallel over spatial tiles instead.
    prefer_split = (spatial_tile is None and num_cores > 1
                    and N < num_cores and S > 256)
    use_fused = (spatial_tile is None
                 and _round_up(S, 128) <= max_tile
                 and not prefer_split)

    if use_fused:
        # Further v7x lever (off by default): pipeline_mode=pl.Buffered(1) on the
        # out_spec frees one slab-sized buffer and lets ~1.5x larger slabs fuse.
        out = pl.pallas_call(
            _fused_kernel,
            out_shape=jax.ShapeDtypeStruct((N, C, S), x_ncdhw.dtype),
            grid_spec=pltpu.PrefetchScalarGridSpec(
                num_scalar_prefetch=0,
                grid=(N,),
                in_specs=[
                    pl.BlockSpec((1, C, S), lambda n: (n, 0, 0)),
                    pl.BlockSpec((C, hidden), lambda n: (0, 0)),
                    pl.BlockSpec((C, hidden), lambda n: (0, 0)),
                ],
                out_specs=pl.BlockSpec((1, C, S), lambda n: (n, 0, 0)),
            ),
            compiler_params=pltpu.CompilerParams(
                dimension_semantics=("parallel",),
                vmem_limit_bytes=vmem_limit),
        )(x_ncs, jnp.transpose(w1), w2)
        return out.reshape(N, C, D, H, W)

    # ---------------- Two-pass path ----------------
    if spatial_tile is not None:
        TS = max(128, _round_up(spatial_tile, 128))
    else:
        TS = _choose_spatial_tile(S, max_tile,
                                  min_tiles=num_cores if prefer_split else 1)
    if TS >= S:
        TS = S                                  # single full-width tile, no mask
    nt = pl.cdiv(S, TS)

    # Pass A: partial per-channel sums, fully parallel over (batch, S tiles).
    psum = pl.pallas_call(
        _make_pool_kernel(S, TS),
        out_shape=jax.ShapeDtypeStruct((N, nt, C, 1), jnp.float32),
        grid_spec=pltpu.PrefetchScalarGridSpec(
            num_scalar_prefetch=0,
            grid=(N, nt),
            in_specs=[pl.BlockSpec((1, C, TS), lambda n, st: (n, 0, st))],
            out_specs=pl.BlockSpec((1, 1, C, 1), lambda n, st: (n, st, 0, 0)),
        ),
        compiler_params=pltpu.CompilerParams(
            dimension_semantics=("parallel", "parallel"),
            vmem_limit_bytes=vmem_limit),
    )(x_ncs)

    # Tiny excite MLP, batched over N in plain XLA (negligible work; keeps the
    # kernels free of finalize-side cross-sublane reductions).
    pooled = jnp.sum(psum, axis=(1, 3)) * (1.0 / S)                        # (N, C)
    h = jnp.maximum(pooled @ jnp.transpose(w1).astype(jnp.float32), 0.0)   # (N, hidden)
    scale = jax.nn.sigmoid(h @ jnp.transpose(w2).astype(jnp.float32))      # (N, C)
    scale = scale.reshape(N, C, 1)

    # Pass B: apply the per-channel scale, fully parallel over (N, S tiles).
    out = pl.pallas_call(
        _scale_kernel,
        out_shape=jax.ShapeDtypeStruct((N, C, S), x_ncdhw.dtype),
        grid_spec=pltpu.PrefetchScalarGridSpec(
            num_scalar_prefetch=0,
            grid=(N, nt),
            in_specs=[pl.BlockSpec((1, C, TS), lambda n, st: (n, 0, st)),
                      pl.BlockSpec((1, C, 1), lambda n, st: (n, 0, 0))],
            out_specs=pl.BlockSpec((1, C, TS), lambda n, st: (n, 0, st)),
        ),
        compiler_params=pltpu.CompilerParams(
            dimension_semantics=("parallel", "parallel"),
            vmem_limit_bytes=vmem_limit),
    )(x_ncs, scale)

    return out.reshape(N, C, D, H, W)


# ---------------------------------------------------------------------------
# Pure-JAX reference (mirrors the PyTorch forward)
# ---------------------------------------------------------------------------
def _reference(x, w1, w2):
    pooled = jnp.mean(x, axis=(2, 3, 4), keepdims=True)            # (N, C, 1, 1, 1)
    h = jnp.einsum('ncdhw,kc->nkdhw', pooled, w1)                  # fc1 (1x1x1 conv)
    h = jnp.maximum(h, 0.0)
    s = jnp.einsum('nkdhw,ck->ncdhw', h, w2)                       # fc2
    return x * jax.nn.sigmoid(s)


if __name__ == "__main__":
    key = jax.random.PRNGKey(0)
    k_x, k_w1, k_w2, k_xo = jax.random.split(key, 4)

    n_feats, ratio = 32, 8
    hidden = n_feats // ratio

    # Conv3d(C, hidden, 1, bias=False).weight is (hidden, C, 1, 1, 1); keep (hidden, C).
    w1 = jax.random.normal(k_w1, (hidden, n_feats), dtype=jnp.float32) * 0.1
    w2 = jax.random.normal(k_w2, (n_feats, hidden), dtype=jnp.float32) * 0.1

    # 1) Fused single-pass path: (N, C, D, H, W) = (2, 32, 4, 8, 8), S = 256.
    x = jax.random.normal(k_x, (2, n_feats, 4, 8, 8), dtype=jnp.float32)
    ref = jax.block_until_ready(_reference(x, w1, w2))
    out = jax.block_until_ready(squeeze_excitation(x, w1, w2))
    np.testing.assert_allclose(np.asarray(out), np.asarray(ref), rtol=1e-5, atol=1e-5)

    # 2) Two-pass tiled path (tile divides S) — forced small tile for testing only.
    out = jax.block_until_ready(squeeze_excitation(x, w1, w2, spatial_tile=128))
    np.testing.assert_allclose(np.asarray(out), np.asarray(ref), rtol=1e-5, atol=1e-5)

    # 3) Two-pass path with a partial (lane-masked) last tile: S = 3*7*7 = 147.
    x_odd = jax.random.normal(k_xo, (2, n_feats, 3, 7, 7), dtype=jnp.float32)
    ref_odd = jax.block_until_ready(_reference(x_odd, w1, w2))
    out_odd = jax.block_until_ready(
        squeeze_excitation(x_odd, w1, w2, spatial_tile=128))
    np.testing.assert_allclose(np.asarray(out_odd), np.asarray(ref_odd),
                               rtol=1e-5, atol=1e-5)

    print("KERNEL_OK")
</pallas_src>

<mosaic_0001>
module attributes {stable_mosaic.version = 11 : i64} {
  func.func @_fused_kernel(%arg0: i32, %arg1: memref<1x32x256xf32, #tpu.memory_space<vmem>>, %arg2: memref<32x4xf32, #tpu.memory_space<vmem>>, %arg3: memref<32x4xf32, #tpu.memory_space<vmem>>, %arg4: memref<1x32x256xf32, #tpu.memory_space<vmem>>) attributes {dimension_semantics = [#tpu.dimension_semantics<parallel>], iteration_bounds = array<i64: 2>, scalar_prefetch = 0 : i64, scratch_operands = 0 : i64, tpu.core_type = #tpu.core_type<tc>, window_params = [{transform_indices = @transform_0, window_bounds = array<i64: 1, 32, 256>}, {pipeline_mode = #tpu.pipeline_mode<synchronous>, transform_indices = @transform_1, window_bounds = array<i64: 32, 4>}, {pipeline_mode = #tpu.pipeline_mode<synchronous>, transform_indices = @transform_2, window_bounds = array<i64: 32, 4>}, {transform_indices = @transform_3, window_bounds = array<i64: 1, 32, 256>}]} {
    %c0 = arith.constant 0 : index
    %c0_0 = arith.constant 0 : index
    %c0_1 = arith.constant 0 : index
    %0 = vector.load %arg1[%c0, %c0_0, %c0_1] : memref<1x32x256xf32, #tpu.memory_space<vmem>>, vector<1x32x256xf32>
    %1 = vector.shape_cast %0 : vector<1x32x256xf32> to vector<32x256xf32>
    %cst = arith.constant dense<0.000000e+00> : vector<32xf32>
    %2 = vector.multi_reduction <add>, %1, %cst [1] : vector<32x256xf32> to vector<32xf32>
    %3 = vector.shape_cast %2 : vector<32xf32> to vector<32x1xf32>
    %cst_2 = arith.constant 2.560000e+02 : f32
    %4 = vector.broadcast %cst_2 : f32 to vector<32x1xf32>
    %5 = arith.divf %3, %4 : vector<32x1xf32>
    %c0_3 = arith.constant 0 : index
    %c0_4 = arith.constant 0 : index
    %6 = vector.load %arg2[%c0_3, %c0_4] : memref<32x4xf32, #tpu.memory_space<vmem>>, vector<32x4xf32>
    %c0_5 = arith.constant 0 : index
    %c0_6 = arith.constant 0 : index
    %7 = vector.load %arg3[%c0_5, %c0_6] : memref<32x4xf32, #tpu.memory_space<vmem>>, vector<32x4xf32>
    %8 = vector.broadcast %5 : vector<32x1xf32> to vector<32x4xf32>
    %9 = arith.mulf %6, %8 : vector<32x4xf32>
    %cst_7 = arith.constant dense<0.000000e+00> : vector<4xf32>
    %10 = vector.multi_reduction <add>, %9, %cst_7 [0] : vector<32x4xf32> to vector<4xf32>
    %11 = vector.shape_cast %10 : vector<4xf32> to vector<1x4xf32>
    %cst_8 = arith.constant 0.000000e+00 : f32
    %12 = vector.broadcast %cst_8 : f32 to vector<1x4xf32>
    %13 = arith.maximumf %11, %12 : vector<1x4xf32>
    %14 = vector.broadcast %13 : vector<1x4xf32> to vector<32x4xf32>
    %15 = arith.mulf %7, %14 : vector<32x4xf32>
    %cst_9 = arith.constant dense<0.000000e+00> : vector<32xf32>
    %16 = vector.multi_reduction <add>, %15, %cst_9 [1] : vector<32x4xf32> to vector<32xf32>
    %17 = vector.shape_cast %16 : vector<32xf32> to vector<32x1xf32>
    %18 = arith.negf %17 : vector<32x1xf32>
    %19 = math.exp %18 : vector<32x1xf32>
    %cst_10 = arith.constant 1.000000e+00 : f32
    %20 = vector.broadcast %cst_10 : f32 to vector<32x1xf32>
    %21 = arith.addf %20, %19 : vector<32x1xf32>
    %22 = arith.divf %20, %21 : vector<32x1xf32>
    %23 = vector.broadcast %22 : vector<32x1xf32> to vector<32x256xf32>
    %24 = arith.mulf %1, %23 : vector<32x256xf32>
    %c0_11 = arith.constant 0 : index
    %c0_12 = arith.constant 0 : index
    %c0_13 = arith.constant 0 : index
    %25 = vector.load %arg4[%c0_11, %c0_12, %c0_13] : memref<1x32x256xf32, #tpu.memory_space<vmem>>, vector<1x32x256xf32>
    %26 = vector.shape_cast %25 : vector<1x32x256xf32> to vector<32x256xf32>
    %27 = vector.shape_cast %24 : vector<32x256xf32> to vector<1x32x256xf32>
    tpu.vector_store %arg4[%c0_11, %c0_12, %c0_13], %27 {strides = array<i32>} : memref<1x32x256xf32, #tpu.memory_space<vmem>>, vector<1x32x256xf32>,
    return
  }
  func.func @transform_0(%arg0: i32) -> (i32, i32, i32) {
    %c0_i32 = arith.constant 0 : i32
    %c0_i32_0 = arith.constant 0 : i32
    %c0_i32_1 = arith.constant 0 : i32
    return %arg0, %c0_i32, %c0_i32_0 : i32, i32, i32
  }
  func.func @transform_1(%arg0: i32) -> (i32, i32) {
    %c0_i32 = arith.constant 0 : i32
    %c0_i32_0 = arith.constant 0 : i32
    %c0_i32_1 = arith.constant 0 : i32
    return %c0_i32, %c0_i32_0 : i32, i32
  }
  func.func @transform_2(%arg0: i32) -> (i32, i32) {
    %c0_i32 = arith.constant 0 : i32
    %c0_i32_0 = arith.constant 0 : i32
    %c0_i32_1 = arith.constant 0 : i32
    return %c0_i32, %c0_i32_0 : i32, i32
  }
  func.func @transform_3(%arg0: i32) -> (i32, i32, i32) {
    %c0_i32 = arith.constant 0 : i32
    %c0_i32_0 = arith.constant 0 : i32
    %c0_i32_1 = arith.constant 0 : i32
    return %arg0, %c0_i32, %c0_i32_0 : i32, i32, i32
  }
}

</mosaic_0001>

<llo_original>
// kernel: tpu_custom_call.1
$region0: #{tpu_custom_call.1}
  #allocation0 [shape = 'u32[]', space=smem, size = 0x4, offset = 0x4, fixed_abs, tag = 'smem constant byte address 0x4 - core index']
  #allocation1 [shape = 'u32[144,128]{1,0:T(1,128)}', space=vmem, size = 0x12000, scoped, tag = 'internal scratch']
  %s0 = inlined_call_operand.hbm [shape: f32[2,32,256], index: 0, kind: input, shape index: {}]
  %s1 = inlined_call_operand.hbm [shape: f32[32,4], index: 1, kind: input, shape index: {}]
  %s2 = inlined_call_operand.hbm [shape: f32[32,4], index: 2, kind: input, shape index: {}]
  %s3 = inlined_call_operand.hbm [shape: f32[2,32,256], index: 3, kind: output, shape index: {}]
  %s4 = sld [smem:[#allocation0]]
  $region57: #{tpu_custom_call.1} parent=0
    _
  %s6 = ssub.s32 1, %s4
  %s7 = scalar_select 0, %s6, %s4
  $region1: #{tpu_custom_call.1} parent=0
    #allocation2 [shape = 'u8[65536]{0}', space=vmem, size = 0x10000, scoped, tag = 'input window, operand 0']
    #allocation3 [shape = 's32[2]{0}', space=sflag, size = 0x8, scoped, tag = 'scoped memory for tpu_custom_call.1']
    #allocation4 [shape = 's32[2]{0}', space=sflag, size = 0x8, scoped, tag = 'scoped memory for tpu_custom_call.1']
    #allocation5 [shape = 'u8[16384]{0}', space=vmem, size = 0x4000, scoped, tag = 'input window, operand 1, single buffered']
    #allocation6 [shape = 's32[1]{0}', space=sflag, size = 0x4, scoped, tag = 'scoped memory for tpu_custom_call.1']
    #allocation7 [shape = 'u8[16384]{0}', space=vmem, size = 0x4000, scoped, tag = 'input window, operand 2, single buffered']
    #allocation8 [shape = 'u8[65536]{0}', space=vmem, size = 0x10000, scoped, tag = 'output window, operand 0']
    %8 = vsyncpa [#allocation3], 0
    %s9 = scalar_lea.sflag [#allocation3], 1
    %10 = vsyncpa %s9, 0
    %11 = vsyncpa [#allocation6], 0
    %12 = vsyncpa [#allocation4], 0
    %s13 = scalar_lea.sflag [#allocation4], 1
    %14 = vsyncpa %s13, 0
    loop: start=0, step=1, limit=4
    $region2: #{tpu_custom_call.1} parent=1 // loop_pre_header
      _
    $region3: #{tpu_custom_call.1} parent=1 // loop_header
      %s16 = sphi 0, %s20
      %p17 = scmp.ge.s32.totalorder %s16, 4
      %s26 = sphi 0, %s28
      %s29 = sphi 0, %s26
      %s30 = sphi 0, %s29
      %s46 = sphi 0, %s30
      %s50 = sphi 0, %s50
      %s52 = sphi 0, %s50
      %s53 = sphi 0, %s52
      %s67 = sphi 0, %s53
      %s71 = sphi 0, %s71
      %s73 = sphi 0, %s71
      %s74 = sphi 0, %s73
      %s88 = sphi 0, %s74
      %s94 = sphi 0, %s96
      %s97 = sphi 0, %s94
      %s98 = sphi 0, %s97
      %s114 = sphi 0, %s98
    $region4: #{tpu_custom_call.1} parent=1 // loop_header_branch
      %19 = sbr.rel (%p17) target = $region8
    $region5: #{tpu_custom_call.1} parent=1 // loop_body
      %s21 = ssub.s32 %s16, 1
      %s22 = ssub.s32 %s16, 2
      %s23 = sadd.s32 %s16, 1
      %s24 = ssub.s32 %s16, %s23
      %p25 = scmp.eq.s32.totalorder %s24, 0
      %s27 = sadd.s32 %s26, 1
      %s28 = scalar_select %p25, %s26, %s27
      %p31 = pneg %p25
      %p32 = scmp.eq.s32.totalorder %s16, 1
      %p33 = por %p31, %p32
      %p34 = scmp.ne.s32.totalorder %s26, %s29
      %p35 = scmp.eq.s32.totalorder %s16, 0
      %p36 = por %p34, %p35
      %p37 = scmp.ne.s32.totalorder %s26, %s29
      %p38 = scmp.eq.s32.totalorder %s21, 1
      %p39 = por %p37, %p38
      %p40 = scmp.ne.s32.totalorder %s29, %s30
      %p41 = scmp.eq.s32.totalorder %s21, 0
      %p42 = por %p40, %p41
      %p43 = scmp.ne.s32.totalorder %s29, %s30
      %p44 = scmp.eq.s32.totalorder %s22, 1
      %p45 = por %p43, %p44
      %p47 = scmp.ne.s32.totalorder %s30, %s46
      %p48 = scmp.eq.s32.totalorder %s22, 0
      %p49 = por %p47, %p48
      %s51 = sadd.s32 %s50, 1
      %p54 = scmp.eq.s32.totalorder %s16, 1
      %p55 = scmp.ne.s32.totalorder %s50, %s52
      %p56 = scmp.eq.s32.totalorder %s16, 0
      %p57 = por %p55, %p56
      %p58 = scmp.ne.s32.totalorder %s50, %s52
      %p59 = scmp.eq.s32.totalorder %s21, 1
      %p60 = por %p58, %p59
      %p61 = scmp.ne.s32.totalorder %s52, %s53
      %p62 = scmp.eq.s32.totalorder %s21, 0
      %p63 = por %p61, %p62
      %p64 = scmp.ne.s32.totalorder %s52, %s53
      %p65 = scmp.eq.s32.totalorder %s22, 1
      %p66 = por %p64, %p65
      %p68 = scmp.ne.s32.totalorder %s53, %s67
      %p69 = scmp.eq.s32.totalorder %s22, 0
      %p70 = por %p68, %p69
      %s72 = sadd.s32 %s71, 1
      %p75 = scmp.eq.s32.totalorder %s16, 1
      %p76 = scmp.ne.s32.totalorder %s71, %s73
      %p77 = scmp.eq.s32.totalorder %s16, 0
      %p78 = por %p76, %p77
      %p79 = scmp.ne.s32.totalorder %s71, %s73
      %p80 = scmp.eq.s32.totalorder %s21, 1
      %p81 = por %p79, %p80
      %p82 = scmp.ne.s32.totalorder %s73, %s74
      %p83 = scmp.eq.s32.totalorder %s21, 0
      %p84 = por %p82, %p83
      %p85 = scmp.ne.s32.totalorder %s73, %s74
      %p86 = scmp.eq.s32.totalorder %s22, 1
      %p87 = por %p85, %p86
      %p89 = scmp.ne.s32.totalorder %s74, %s88
      %p90 = scmp.eq.s32.totalorder %s22, 0
      %p91 = por %p89, %p90
      %s92 = ssub.s32 %s16, %s23
      %p93 = scmp.eq.s32.totalorder %s92, 0
      %s95 = sadd.s32 %s94, 1
      %s96 = scalar_select %p93, %s94, %s95
      %p99 = pneg %p93
      %p100 = scmp.eq.s32.totalorder %s16, 1
      %p101 = por %p99, %p100
      %p102 = scmp.ne.s32.totalorder %s94, %s97
      %p103 = scmp.eq.s32.totalorder %s16, 0
      %p104 = por %p102, %p103
      %p105 = scmp.ne.s32.totalorder %s94, %s97
      %p106 = scmp.eq.s32.totalorder %s21, 1
      %p107 = por %p105, %p106
      %p108 = scmp.ne.s32.totalorder %s97, %s98
      %p109 = scmp.eq.s32.totalorder %s21, 0
      %p110 = por %p108, %p109
      %p111 = scmp.ne.s32.totalorder %s97, %s98
      %p112 = scmp.eq.s32.totalorder %s22, 1
      %p113 = por %p111, %p112
      %p115 = scmp.ne.s32.totalorder %s98, %s114
      %p116 = scmp.eq.s32.totalorder %s22, 0
      %p117 = por %p115, %p116
      %p118 = scmp.le.s32.totalorder 1, %s16
      %p119 = scmp.lt.s32.totalorder %s16, 3
      %p120 = pnand %p118, %p119
      %p121 = pneg %p120
      // Predicated region
      $region9: #{tpu_custom_call.1} parent=5 // pred_check
        _
      $region10: #{tpu_custom_call.1} parent=5 // pred_check_branch
        %123 = sbr.rel (%p120) target = $region12
      $region11: #{tpu_custom_call.1} parent=5 // pred_region
        %s124 = ssub.s32 %s16, 1
        // Predicated region
        $region13: #{tpu_custom_call.1} parent=11 // pred_check
          %p125 = pneg %p63
        $region14: #{tpu_custom_call.1} parent=11 // pred_check_branch
          %127 = sbr.rel (%p125) target = $region16
        $region15: #{tpu_custom_call.1} parent=11 // pred_region
          %s129 = ssub.s32 512, 512
          %130 = vsyncadd [#allocation6], %s129
          %s131 = sshll.u32 [#allocation5], 4
          %s132 = int_to_ptr.vmem [resolvable:$true] %s131
          %137 = dma.hbm_to_vmem [thread:$0]  %s1, 512, %s132, [#allocation6], 128, 128, 8
        $region16: #{tpu_custom_call.1} parent=11 // pred_fallthru
          _
        // Predicated region
        $region17: #{tpu_custom_call.1} parent=11 // pred_check
          %p138 = pneg %p84
        $region18: #{tpu_custom_call.1} parent=11 // pred_check_branch
          %140 = sbr.rel (%p138) target = $region20
        $region19: #{tpu_custom_call.1} parent=11 // pred_region
          %s142 = ssub.s32 512, 512
          %143 = vsyncadd [#allocation6], %s142
          %s144 = sshll.u32 [#allocation7], 4
          %s145 = int_to_ptr.vmem [resolvable:$true] %s144
          %150 = dma.hbm_to_vmem [thread:$0]  %s2, 512, %s145, [#allocation6], 128, 128, 8
        $region20: #{tpu_custom_call.1} parent=11 // pred_fallthru
          _
      $region12: #{tpu_custom_call.1} parent=5 // pred_fallthru
        _
      %p151 = scmp.lt.s32.totalorder %s16, 2
      // Predicated region
      $region21: #{tpu_custom_call.1} parent=5 // pred_check
        %p152 = pneg %p151
      $region22: #{tpu_custom_call.1} parent=5 // pred_check_branch
        %154 = sbr.rel (%p152) target = $region24
      $region23: #{tpu_custom_call.1} parent=5 // pred_region
        // Predicated region
        $region25: #{tpu_custom_call.1} parent=23 // pred_check
          %p155 = pneg %p36
        $region26: #{tpu_custom_call.1} parent=23 // pred_check_branch
          %157 = sbr.rel (%p155) target = $region28
        $region27: #{tpu_custom_call.1} parent=23 // pred_region
          %s158 = sand.u32 %s26, 1
          %s159 = scalar_lea.sflag [#allocation3], %s158
          %s160 = sand.u32 %s26, 1
          %s161 = smul.addr %s160, 64
          %s162 = scalar_lea.vmem [#allocation2], %s161
          %s164 = ssub.s32 1024, 1024
          %165 = vsyncadd %s159, %s164
          %s166 = smul.addr %s16, 8
          %s167 = smul.addr %s166, 128
          %s168 = scalar_lea.hbm %s0, %s167
          %s169 = sshll.u32 %s162, 4
          %s170 = int_to_ptr.vmem [resolvable:$true] %s169
          %175 = dma.hbm_to_vmem [thread:$0]  %s168, 1024, %s170, %s159, 256, 256, 16
        $region28: #{tpu_custom_call.1} parent=23 // pred_fallthru
          _
      $region24: #{tpu_custom_call.1} parent=5 // pred_fallthru
        _
      %p176 = scmp.le.s32.totalorder 1, %s16
      %p177 = scmp.lt.s32.totalorder %s16, 3
      %p178 = pnand %p176, %p177
      %p179 = pneg %p178
      // Predicated region
      $region29: #{tpu_custom_call.1} parent=5 // pred_check
        _
      $region30: #{tpu_custom_call.1} parent=5 // pred_check_branch
        %181 = sbr.rel (%p178) target = $region32
      $region31: #{tpu_custom_call.1} parent=5 // pred_region
        %s182 = ssub.s32 %s16, 1
        %s183 = sand.u32 %s29, 1
        %s184 = scalar_lea.sflag [#allocation3], %s183
        %s185 = sand.u32 %s29, 1
        %s186 = smul.addr %s185, 64
        %s187 = scalar_lea.vmem [#allocation2], %s186
        // Predicated region
        $region33: #{tpu_custom_call.1} parent=31 // pred_check
          %p188 = pneg %p42
        $region34: #{tpu_custom_call.1} parent=31 // pred_check_branch
          %190 = sbr.rel (%p188) target = $region36
        $region35: #{tpu_custom_call.1} parent=31 // pred_region
          %191 = dma.done %s184, 1024
        $region36: #{tpu_custom_call.1} parent=31 // pred_fallthru
          _
        // Predicated region
        $region37: #{tpu_custom_call.1} parent=31 // pred_check
          %p192 = pneg %p63
        $region38: #{tpu_custom_call.1} parent=31 // pred_check_branch
          %194 = sbr.rel (%p192) target = $region40
        $region39: #{tpu_custom_call.1} parent=31 // pred_region
          %195 = dma.done [#allocation6], 512
        $region40: #{tpu_custom_call.1} parent=31 // pred_fallthru
          _
        // Predicated region
        $region41: #{tpu_custom_call.1} parent=31 // pred_check
          %p196 = pneg %p84
        $region42: #{tpu_custom_call.1} parent=31 // pred_check_branch
          %198 = sbr.rel (%p196) target = $region44
        $region43: #{tpu_custom_call.1} parent=31 // pred_region
          %199 = dma.done [#allocation6], 512
        $region44: #{tpu_custom_call.1} parent=31 // pred_fallthru
          _
        %s200 = sand.u32 %s29, 1
        %s201 = scalar_lea.sflag [#allocation3], %s200
        %s202 = sand.u32 %s29, 1
        %s203 = smul.addr %s202, 64
        %s204 = scalar_lea.vmem [#allocation2], %s203
        %p205 = pneg %p42
        %p206 = pneg %p39
        %p207 = pneg %p63
        %p208 = pneg %p60
        %p209 = pneg %p84
        %p210 = pneg %p81
        %p211 = pneg %p110
        %p212 = pneg %p107
        %s213 = sand.u32 %s97, 1
        %s214 = scalar_lea.sflag [#allocation4], %s213
        %s215 = sand.u32 %s97, 1
        %s216 = smul.addr %s215, 64
        %s217 = scalar_lea.vmem [#allocation8], %s216
        %v218 = vld [vmem:[%s187] sm:$0xff]
        %v219 = vld [vmem:[%s187 + $0x8] sm:$0xff]
        %v220 = vld [vmem:[%s187 + $0x10] sm:$0xff]
        %v221 = vld [vmem:[%s187 + $0x18] sm:$0xff]
        %v222 = vld [vmem:[%s187 + $0x20] sm:$0xff]
        %v223 = vld [vmem:[%s187 + $0x28] sm:$0xff]
        %v224 = vld [vmem:[%s187 + $0x30] sm:$0xff]
        %v225 = vld [vmem:[%s187 + $0x38] sm:$0xff]
        %v226 = vadd.f32 %v218, %v219
        %227 = vadd.xlane.f32.xlu0 %v226
        %v228 = vpop.xlane.xlu0 %227
        %v229 = vadd.f32 %v220, %v221
        %230 = vadd.xlane.f32.xlu0 %v229
        %v231 = vpop.xlane.xlu0 %230
        %v232 = vadd.f32 %v222, %v223
        %233 = vadd.xlane.f32.xlu0 %v232
        %v234 = vpop.xlane.xlu0 %233
        %v235 = vadd.f32 %v224, %v225
        %236 = vadd.xlane.f32.xlu0 %v235
        %v237 = vpop.xlane.xlu0 %236
        %v238 = vrcp.pop 256.0
        %v239 = vmul.f32 %v228, %v238
        %v240 = vmul.f32 %v231, %v238
        %v241 = vmul.f32 %v234, %v238
        %v242 = vmul.f32 %v237, %v238
        %v243 = vld [vmem:[#allocation5] sm:$0xff]
        %v244 = vld [vmem:[#allocation5 + $0x8] sm:$0xff]
        %v245 = vld [vmem:[#allocation5 + $0x10] sm:$0xff]
        %v246 = vld [vmem:[#allocation5 + $0x18] sm:$0xff]
        %v247 = vld [vmem:[#allocation7] sm:$0xff]
        %v248 = vld [vmem:[#allocation7 + $0x8] sm:$0xff]
        %v249 = vld [vmem:[#allocation7 + $0x10] sm:$0xff]
        %v250 = vld [vmem:[#allocation7 + $0x18] sm:$0xff]
        %v251 = vmul.f32 %v243, %v239
        %v252 = vmul.f32 %v244, %v240
        %v253 = vmul.f32 %v245, %v241
        %v254 = vmul.f32 %v246, %v242
        %vm255 = vcmask 31744
        %v256 = vsel %vm255, %v251, 0.0
        %v257 = vsel %vm255, %v252, 0.0
        %v258 = vadd.f32 %v256, %v257
        %v259 = vsel %vm255, %v253, 0.0
        %v260 = vadd.f32 %v258, %v259
        %v261 = vsel %vm255, %v254, 0.0
        %v262 = vadd.f32 %v260, %v261
        %v263 = vrot.slane %v262, 4
        %v264 = vadd.f32 %v262, %v263
        %v265 = vrot.slane %v264, 2
        %v266 = vadd.f32 %v264, %v265
        %v267 = vrot.slane %v266, 1
        %v268 = vadd.f32 %v266, %v267
        %v269 = vmax.f32 %v268, 0.0
        %v270 = vmul.f32 %v247, %v269
        %v271 = vmul.f32 %v248, %v269
        %v272 = vmul.f32 %v249, %v269
        %v273 = vmul.f32 %v250, %v269
        %v274 = vsel %vm255, %v270, 0.0
        %275 = vadd.xlane.f32.xlu0 %v274
        %v276 = vpop.xlane.xlu0 %275
        %v277 = vsel %vm255, %v271, 0.0
        %278 = vadd.xlane.f32.xlu0 %v277
        %v279 = vpop.xlane.xlu0 %278
        %v280 = vsel %vm255, %v272, 0.0
        %281 = vadd.xlane.f32.xlu0 %v280
        %v282 = vpop.xlane.xlu0 %281
        %v283 = vsel %vm255, %v273, 0.0
        %284 = vadd.xlane.f32.xlu0 %v283
        %v285 = vpop.xlane.xlu0 %284
        %v286 = vxor.u32 %v276, 2147483648
        %v287 = vxor.u32 %v279, 2147483648
        %v288 = vxor.u32 %v282, 2147483648
        %v289 = vxor.u32 %v285, 2147483648
        %v290 = vmul.f32 %v286, 1.442695
        %v291 = vpow.pop %v290
        %v292 = vmul.f32 %v287, 1.442695
        %v293 = vpow.pop %v292
        %v294 = vmul.f32 %v288, 1.442695
        %v295 = vpow.pop %v294
        %v296 = vmul.f32 %v289, 1.442695
        %v297 = vpow.pop %v296
        %v298 = vadd.f32 %v291, 1.0
        %v299 = vadd.f32 %v293, 1.0
        %v300 = vadd.f32 %v295, 1.0
        %v301 = vadd.f32 %v297, 1.0
        %v302 = vrcp.pop %v298
        %v303 = vmul.f32 1.0, %v302
        %v304 = vrcp.pop %v299
        %v305 = vmul.f32 1.0, %v304
        %v306 = vrcp.pop %v300
        %v307 = vmul.f32 1.0, %v306
        %v308 = vrcp.pop %v301
        %v309 = vmul.f32 1.0, %v308
        %v310 = vmul.f32 %v218, %v303
        %v311 = vmul.f32 %v219, %v303
        %v312 = vmul.f32 %v220, %v305
        %v313 = vmul.f32 %v221, %v305
        %v314 = vmul.f32 %v222, %v307
        %v315 = vmul.f32 %v223, %v307
        %v316 = vmul.f32 %v224, %v309
        %v317 = vmul.f32 %v225, %v309
        %318 = vst [vmem:[%s217] sm:$0xff] %v310
        %319 = vst [vmem:[%s217 + $0x8] sm:$0xff] %v311
        %320 = vst [vmem:[%s217 + $0x10] sm:$0xff] %v312
        %321 = vst [vmem:[%s217 + $0x18] sm:$0xff] %v313
        %322 = vst [vmem:[%s217 + $0x20] sm:$0xff] %v314
        %323 = vst [vmem:[%s217 + $0x28] sm:$0xff] %v315
        %324 = vst [vmem:[%s217 + $0x30] sm:$0xff] %v316
        %325 = vst [vmem:[%s217 + $0x38] sm:$0xff] %v317
        %s326 = sand.u32 %s97, 1
        %s327 = scalar_lea.sflag [#allocation4], %s326
        %s328 = sand.u32 %s97, 1
        %s329 = smul.addr %s328, 64
        %s330 = scalar_lea.vmem [#allocation8], %s329
        // Predicated region
        $region45: #{tpu_custom_call.1} parent=31 // pred_check
          %p331 = pneg %p107
        $region46: #{tpu_custom_call.1} parent=31 // pred_check_branch
          %333 = sbr.rel (%p331) target = $region48
        $region47: #{tpu_custom_call.1} parent=31 // pred_region
          %s335 = ssub.s32 1024, 1024
          %336 = vsyncadd %s327, %s335
          %s337 = smul.addr %s21, 8
          %s338 = smul.addr %s337, 128
          %s339 = scalar_lea.hbm %s3, %s338
          %s340 = sshll.u32 %s330, 4
          %s341 = int_to_ptr.vmem [resolvable:$true] %s340
          %346 = dma.vmem_to_hbm [thread:$0]  %s341, 1024, %s339, %s327, 256, 256, 16
        $region48: #{tpu_custom_call.1} parent=31 // pred_fallthru
          _
      $region32: #{tpu_custom_call.1} parent=5 // pred_fallthru
        _
      %p347 = scmp.le.s32.totalorder 2, %s16
      // Predicated region
      $region49: #{tpu_custom_call.1} parent=5 // pred_check
        %p348 = pneg %p347
      $region50: #{tpu_custom_call.1} parent=5 // pred_check_branch
        %350 = sbr.rel (%p348) target = $region52
      $region51: #{tpu_custom_call.1} parent=5 // pred_region
        %s351 = ssub.s32 %s16, 2
        // Predicated region
        $region53: #{tpu_custom_call.1} parent=51 // pred_check
          %p352 = pneg %p113
        $region54: #{tpu_custom_call.1} parent=51 // pred_check_branch
          %354 = sbr.rel (%p352) target = $region56
        $region55: #{tpu_custom_call.1} parent=51 // pred_region
          %s355 = sand.u32 %s98, 1
          %s356 = scalar_lea.sflag [#allocation4], %s355
          %s357 = sand.u32 %s98, 1
          %s358 = smul.addr %s357, 64
          %s359 = scalar_lea.vmem [#allocation8], %s358
          %360 = dma.done %s356, 1024
        $region56: #{tpu_custom_call.1} parent=51 // pred_fallthru
          _
      $region52: #{tpu_custom_call.1} parent=5 // pred_fallthru
        _
    $region6: #{tpu_custom_call.1} parent=1 // loop_footer
      %s20 = sadd.s32 1, %s16
    $region7: #{tpu_custom_call.1} parent=1 // loop_footer_branch
      %15 = sbr.rel target = $region3
    $region8: #{tpu_custom_call.1} parent=1 // loop_exit
      _
    %361 = vsyncpa [#allocation3], 1
    %s362 = scalar_lea.sflag [#allocation3], 1
    %363 = vsyncpa %s362, 1
    %364 = vsyncpa [#allocation6], 1
    %365 = vsyncpa [#allocation4], 1
    %s366 = scalar_lea.sflag [#allocation4], 1
    %367 = vsyncpa %s366, 1

</llo_original>
